<compile_context>
chip_gen: v7x
topology: tpu7x:2x2x1
jax: 0.10.0
libtpu: 0.0.40
codegen_flags: <defaults>
</compile_context>

<pallas_src>
import math

import jax
import jax.numpy as jnp
from jax.experimental import pallas as pl
from jax.experimental.pallas import tpu as pltpu


def _round_up(n: int, m: int) -> int:
    return ((n + m - 1) // m) * m


def _critic_kernel(x_ref, a_ref,
                   w1_ref, b1_ref,
                   w2h_ref, w2a_ref, b2_ref,
                   w3_ref, b3_ref,
                   w4_ref, b4_ref,
                   out_ref):
    # bf16 operands for the MXU; accumulate in f32. (No-op if inputs are bf16.)
    x = x_ref[...].astype(jnp.bfloat16)
    a = a_ref[...].astype(jnp.bfloat16)

    # fc1 + relu
    h1 = jnp.dot(x, w1_ref[...], preferred_element_type=jnp.float32) + b1_ref[...]
    h1 = jnp.maximum(h1, 0.0)

    # fc2 over torch.cat([h1, a], 1) + relu, as two aligned matmuls sharing a
    # single f32 accumulator (avoids an in-kernel concat / ragged-K operand).
    h2 = jnp.dot(h1.astype(jnp.bfloat16), w2h_ref[...],
                 preferred_element_type=jnp.float32)
    h2 = h2 + jnp.dot(a, w2a_ref[...], preferred_element_type=jnp.float32)
    h2 = jnp.maximum(h2 + b2_ref[...], 0.0)

    # fc3 + relu
    h3 = (jnp.dot(h2.astype(jnp.bfloat16), w3_ref[...],
                  preferred_element_type=jnp.float32) + b3_ref[...])
    h3 = jnp.maximum(h3, 0.0)

    # fc4 (scalar Q per example): VPU broadcast-mul + XLU lane reduction, then
    # store as a lane-dense (1, TB) row (unmasked vst).
    q = jnp.sum(h3 * w4_ref[...], axis=-1)           # (TB,)
    q = q.reshape(1, -1) + b4_ref[...]                # (1, TB) + (1, 1)
    out_ref[...] = q.astype(out_ref.dtype)


def critic_forward(x, a, packed_params, *, batch_tile=512, input_buffers=2):
    """x: [B, nb_states], a: [B, nb_actions] -> [B, 1] float32."""
    (w1, b1, w2h, w2a, b2, w3, b3, w4row, b4) = packed_params
    B, S = x.shape
    A = a.shape[1]

    # --- batch tiling ------------------------------------------------------
    # TB is a multiple of 128 whenever there is more than one tile so the
    # lane-dense (1, TB) output blocks stay unmasked; when B > 128 we emit at
    # least 2 tiles so both v7x TensorCores get work (harmless on v5e/v6e).
    batch_tile = max(128, _round_up(batch_tile, 128))
    B8 = _round_up(B, 8)
    if B8 <= 128:
        TB = B8                                   # single small tile
    else:
        n_tiles = max(2, pl.cdiv(B8, batch_tile))
        TB = min(batch_tile, _round_up(pl.cdiv(B8, n_tiles), 128))
    Bp = _round_up(B, TB)
    if Bp != B:
        # Padded rows produce garbage Q (bias propagates through relu) but are
        # sliced off below; nothing downstream ever sees them.
        x = jnp.pad(x, ((0, Bp - B), (0, 0)))
        a = jnp.pad(a, ((0, Bp - B), (0, 0)))

    grid = (Bp // TB,)

    def batch_spec(cols):
        if input_buffers == 2:
            return pl.BlockSpec((TB, cols), lambda i: (i, 0))
        return pl.BlockSpec((TB, cols), lambda i: (i, 0),
                            pipeline_mode=pl.Buffered(input_buffers))

    def resident_spec(arr):
        # Whole array as one block; constant index_map keeps it VMEM-resident
        # across all batch tiles (no re-DMA).
        zeros = (0,) * arr.ndim
        return pl.BlockSpec(arr.shape, lambda i: zeros)

    weights = (w1, b1, w2h, w2a, b2, w3, b3, w4row, b4)
    in_specs = [batch_spec(S), batch_spec(A)] + [resident_spec(w) for w in weights]

    H1p = w1.shape[1]
    H2p = w2h.shape[1]
    H3p = w3.shape[1]

    flops = 2 * Bp * (S * H1p + H1p * H2p + A * H2p + H2p * H3p + H3p)
    weight_bytes = sum(int(w.size) * w.dtype.itemsize for w in weights)
    bytes_accessed = int(
        x.size * x.dtype.itemsize
        + a.size * a.dtype.itemsize
        + weight_bytes
        + Bp * 4)

    # Explicit scoped-VMEM limit: generous estimate (weights + buffered input
    # tiles + f32 activation temporaries), floored at 32 MiB, capped well under
    # v7x's 64 MiB physical VMEM.
    in_tile_bytes = TB * (S * x.dtype.itemsize + A * a.dtype.itemsize)
    act_bytes = 4 * TB * (H1p + H2p + H3p) * 4
    est = weight_bytes + max(2, input_buffers) * in_tile_bytes + 2 * TB * 4 + act_bytes
    vmem_limit = int(min(max(2 * est, 32 << 20), 48 << 20))

    out_row = pl.pallas_call(
        _critic_kernel,
        out_shape=jax.ShapeDtypeStruct((1, Bp), jnp.float32),
        grid=grid,
        in_specs=in_specs,
        out_specs=pl.BlockSpec((1, TB), lambda i: (0, i)),
        compiler_params=pltpu.CompilerParams(
            dimension_semantics=("parallel",),
            vmem_limit_bytes=vmem_limit),
        cost_estimate=pl.CostEstimate(
            flops=flops, transcendentals=0, bytes_accessed=bytes_accessed),
    )(x, a, *weights)

    return out_row.reshape(Bp, 1)[:B]


def init_critic_params(key, nb_states, nb_actions, hidden1, hidden2, hidden3,
                       init_w=0.003):
    """Deterministic init mimicking the PyTorch module.

    PyTorch nn.Linear stores weight as (out, in); fanin_init uses size[0]
    (== out_features) as fanin, so v = 1/sqrt(out_features) for fc1..fc3.
    Biases keep the default nn.Linear init: U(-1/sqrt(in), 1/sqrt(in)).
    Weights are returned already transposed to (in, out).
    """
    ks = jax.random.split(key, 9)

    def uni(k, shape, bound):
        return jax.random.uniform(k, shape, jnp.float32, -bound, bound)

    w1 = uni(ks[0], (nb_states, hidden1), 1.0 / math.sqrt(hidden1))
    b1 = uni(ks[1], (1, hidden1), 1.0 / math.sqrt(nb_states))

    v2 = 1.0 / math.sqrt(hidden2)
    w2h = uni(ks[2], (hidden1, hidden2), v2)
    w2a = uni(ks[3], (nb_actions, hidden2), v2)
    b2 = uni(ks[4], (1, hidden2), 1.0 / math.sqrt(hidden1 + nb_actions))

    w3 = uni(ks[5], (hidden2, hidden3), 1.0 / math.sqrt(hidden3))
    b3 = uni(ks[6], (1, hidden3), 1.0 / math.sqrt(hidden2))

    w4 = uni(ks[7], (hidden3, 1), init_w)
    b4 = uni(ks[8], (1, 1), 1.0 / math.sqrt(hidden3))

    return (w1, b1, w2h, w2a, b2, w3, b3, w4, b4)


def pack_critic_params(raw):
    """Pad hidden dims to multiples of 128 and cast matmul weights to bf16.

    W2 stays split into its hidden-rows and action-rows blocks so the kernel
    can run fc2 as two aligned matmuls instead of a concat + ragged-K matmul.
    Padding columns/rows are zero, so results are numerically unchanged.
    """
    (w1, b1, w2h, w2a, b2, w3, b3, w4, b4) = raw
    S, H1 = w1.shape
    A, H2 = w2a.shape
    H3 = w3.shape[1]
    H1p, H2p, H3p = (_round_up(h, 128) for h in (H1, H2, H3))

    def pad2(arr, rows, cols):
        return jnp.pad(arr, ((0, rows - arr.shape[0]), (0, cols - arr.shape[1])))

    w1p = pad2(w1, S, H1p).astype(jnp.bfloat16)
    b1p = pad2(b1, 1, H1p)
    w2hp = pad2(w2h, H1p, H2p).astype(jnp.bfloat16)
    w2ap = pad2(w2a, A, H2p).astype(jnp.bfloat16)
    b2p = pad2(b2, 1, H2p)
    w3p = pad2(w3, H2p, H3p).astype(jnp.bfloat16)
    b3p = pad2(b3, 1, H3p)
    w4row = pad2(w4.T, 1, H3p)  # kept f32: used on the VPU, not the MXU
    return (w1p, b1p, w2hp, w2ap, b2p, w3p, b3p, w4row, b4)


def critic_reference(x, a, packed):
    """Plain-JAX reference matching the kernel's bf16-matmul / f32-accum math."""
    (w1, b1, w2h, w2a, b2, w3, b3, w4row, b4) = packed
    xb = x.astype(jnp.bfloat16)
    ab = a.astype(jnp.bfloat16)
    h1 = jnp.maximum(jnp.dot(xb, w1, preferred_element_type=jnp.float32) + b1, 0.0)
    h2 = (jnp.dot(h1.astype(jnp.bfloat16), w2h, preferred_element_type=jnp.float32)
          + jnp.dot(ab, w2a, preferred_element_type=jnp.float32) + b2)
    h2 = jnp.maximum(h2, 0.0)
    h3 = jnp.maximum(
        jnp.dot(h2.astype(jnp.bfloat16), w3, preferred_element_type=jnp.float32) + b3,
        0.0)
    return jnp.sum(h3 * w4row, axis=-1, keepdims=True) + b4


if __name__ == "__main__":
    # Small shapes consistent with the module's forward (2-D state/action inputs).
    nb_states = 32
    nb_actions = 8
    hidden1, hidden2, hidden3 = 128, 128, 64  # hidden3=64 exercises the pad-to-128 path

    key = jax.random.PRNGKey(0)
    kx, ka, kp = jax.random.split(key, 3)
    params = pack_critic_params(
        init_critic_params(kp, nb_states, nb_actions, hidden1, hidden2, hidden3))

    # 1) tiny batch -> single-tile path
    B = 8
    x = jax.random.normal(kx, (B, nb_states), jnp.float32)
    a = jax.random.normal(ka, (B, nb_actions), jnp.float32)
    q = jax.block_until_ready(critic_forward(x, a, params))
    q_ref = critic_reference(x, a, params)
    assert q.shape == (B, 1)
    assert jnp.allclose(q, q_ref, atol=1e-3, rtol=1e-2)

    # 2) larger batch -> multi-tile path (2 parallel tiles, padded batch)
    B2 = 200
    x2 = jax.random.normal(kx, (B2, nb_states), jnp.float32)
    a2 = jax.random.normal(ka, (B2, nb_actions), jnp.float32)
    q2 = jax.block_until_ready(critic_forward(x2, a2, params))
    q2_ref = critic_reference(x2, a2, params)
    assert q2.shape == (B2, 1)
    assert jnp.allclose(q2, q2_ref, atol=1e-3, rtol=1e-2)

    print("KERNEL_OK")
</pallas_src>

<mosaic_0001>
module attributes {stable_mosaic.version = 11 : i64} {
  func.func @_critic_kernel(%arg0: i32, %arg1: memref<8x32xf32, #tpu.memory_space<vmem>>, %arg2: memref<8x8xf32, #tpu.memory_space<vmem>>, %arg3: memref<32x128xbf16, #tpu.memory_space<vmem>>, %arg4: memref<1x128xf32, #tpu.memory_space<vmem>>, %arg5: memref<128x128xbf16, #tpu.memory_space<vmem>>, %arg6: memref<8x128xbf16, #tpu.memory_space<vmem>>, %arg7: memref<1x128xf32, #tpu.memory_space<vmem>>, %arg8: memref<128x128xbf16, #tpu.memory_space<vmem>>, %arg9: memref<1x128xf32, #tpu.memory_space<vmem>>, %arg10: memref<1x128xf32, #tpu.memory_space<vmem>>, %arg11: memref<1x1xf32, #tpu.memory_space<vmem>>, %arg12: memref<1x8xf32, #tpu.memory_space<vmem>>) attributes {dimension_semantics = [#tpu.dimension_semantics<parallel>], iteration_bounds = array<i64: 1>, scalar_prefetch = 0 : i64, scratch_operands = 0 : i64, tpu.core_type = #tpu.core_type<tc>, window_params = [{transform_indices = @transform_0, window_bounds = array<i64: 8, 32>}, {transform_indices = @transform_1, window_bounds = array<i64: 8, 8>}, {pipeline_mode = #tpu.pipeline_mode<synchronous>, transform_indices = @transform_2, window_bounds = array<i64: 32, 128>}, {pipeline_mode = #tpu.pipeline_mode<synchronous>, transform_indices = @transform_3, window_bounds = array<i64: 1, 128>}, {pipeline_mode = #tpu.pipeline_mode<synchronous>, transform_indices = @transform_4, window_bounds = array<i64: 128, 128>}, {pipeline_mode = #tpu.pipeline_mode<synchronous>, transform_indices = @transform_5, window_bounds = array<i64: 8, 128>}, {pipeline_mode = #tpu.pipeline_mode<synchronous>, transform_indices = @transform_6, window_bounds = array<i64: 1, 128>}, {pipeline_mode = #tpu.pipeline_mode<synchronous>, transform_indices = @transform_7, window_bounds = array<i64: 128, 128>}, {pipeline_mode = #tpu.pipeline_mode<synchronous>, transform_indices = @transform_8, window_bounds = array<i64: 1, 128>}, {pipeline_mode = #tpu.pipeline_mode<synchronous>, transform_indices = @transform_9, window_bounds = array<i64: 1, 128>}, {pipeline_mode = #tpu.pipeline_mode<synchronous>, transform_indices = @transform_10, window_bounds = array<i64: 1, 1>}, {transform_indices = @transform_11, window_bounds = array<i64: 1, 8>}]} {
    %c0 = arith.constant 0 : index
    %c0_0 = arith.constant 0 : index
    %0 = vector.load %arg1[%c0, %c0_0] : memref<8x32xf32, #tpu.memory_space<vmem>>, vector<8x32xf32>
    %1 = arith.truncf %0 : vector<8x32xf32> to vector<8x32xbf16>
    %c0_1 = arith.constant 0 : index
    %c0_2 = arith.constant 0 : index
    %2 = vector.load %arg2[%c0_1, %c0_2] : memref<8x8xf32, #tpu.memory_space<vmem>>, vector<8x8xf32>
    %3 = arith.truncf %2 : vector<8x8xf32> to vector<8x8xbf16>
    %c0_3 = arith.constant 0 : index
    %c0_4 = arith.constant 0 : index
    %4 = vector.load %arg3[%c0_3, %c0_4] : memref<32x128xbf16, #tpu.memory_space<vmem>>, vector<32x128xbf16>
    %cst = arith.constant dense<0.000000e+00> : vector<8x128xf32>
    %5 = tpu.matmul %1, %4, %cst {dimension_numbers = #tpu.dot_dimension_numbers<[1], [0], [0], [1], [0, 0, 1, 1], [], []>} : vector<8x32xbf16>, vector<32x128xbf16>, vector<8x128xf32> -> vector<8x128xf32>
    %c0_5 = arith.constant 0 : index
    %c0_6 = arith.constant 0 : index
    %6 = vector.load %arg4[%c0_5, %c0_6] : memref<1x128xf32, #tpu.memory_space<vmem>>, vector<1x128xf32>
    %7 = vector.broadcast %6 : vector<1x128xf32> to vector<8x128xf32>
    %8 = arith.addf %5, %7 : vector<8x128xf32>
    %cst_7 = arith.constant 0.000000e+00 : f32
    %9 = vector.broadcast %cst_7 : f32 to vector<8x128xf32>
    %10 = arith.maximumf %8, %9 : vector<8x128xf32>
    %11 = arith.truncf %10 : vector<8x128xf32> to vector<8x128xbf16>
    %c0_8 = arith.constant 0 : index
    %c0_9 = arith.constant 0 : index
    %12 = vector.load %arg5[%c0_8, %c0_9] : memref<128x128xbf16, #tpu.memory_space<vmem>>, vector<128x128xbf16>
    %cst_10 = arith.constant dense<0.000000e+00> : vector<8x128xf32>
    %13 = tpu.matmul %11, %12, %cst_10 {dimension_numbers = #tpu.dot_dimension_numbers<[1], [0], [0], [1], [0, 0, 1, 1], [], []>} : vector<8x128xbf16>, vector<128x128xbf16>, vector<8x128xf32> -> vector<8x128xf32>
    %c0_11 = arith.constant 0 : index
    %c0_12 = arith.constant 0 : index
    %14 = vector.load %arg6[%c0_11, %c0_12] : memref<8x128xbf16, #tpu.memory_space<vmem>>, vector<8x128xbf16>
    %cst_13 = arith.constant dense<0.000000e+00> : vector<8x128xf32>
    %15 = tpu.matmul %3, %14, %cst_13 {dimension_numbers = #tpu.dot_dimension_numbers<[1], [0], [0], [1], [0, 0, 1, 1], [], []>} : vector<8x8xbf16>, vector<8x128xbf16>, vector<8x128xf32> -> vector<8x128xf32>
    %16 = arith.addf %13, %15 : vector<8x128xf32>
    %c0_14 = arith.constant 0 : index
    %c0_15 = arith.constant 0 : index
    %17 = vector.load %arg7[%c0_14, %c0_15] : memref<1x128xf32, #tpu.memory_space<vmem>>, vector<1x128xf32>
    %18 = vector.broadcast %17 : vector<1x128xf32> to vector<8x128xf32>
    %19 = arith.addf %16, %18 : vector<8x128xf32>
    %cst_16 = arith.constant 0.000000e+00 : f32
    %20 = vector.broadcast %cst_16 : f32 to vector<8x128xf32>
    %21 = arith.maximumf %19, %20 : vector<8x128xf32>
    %22 = arith.truncf %21 : vector<8x128xf32> to vector<8x128xbf16>
    %c0_17 = arith.constant 0 : index
    %c0_18 = arith.constant 0 : index
    %23 = vector.load %arg8[%c0_17, %c0_18] : memref<128x128xbf16, #tpu.memory_space<vmem>>, vector<128x128xbf16>
    %cst_19 = arith.constant dense<0.000000e+00> : vector<8x128xf32>
    %24 = tpu.matmul %22, %23, %cst_19 {dimension_numbers = #tpu.dot_dimension_numbers<[1], [0], [0], [1], [0, 0, 1, 1], [], []>} : vector<8x128xbf16>, vector<128x128xbf16>, vector<8x128xf32> -> vector<8x128xf32>
    %c0_20 = arith.constant 0 : index
    %c0_21 = arith.constant 0 : index
    %25 = vector.load %arg9[%c0_20, %c0_21] : memref<1x128xf32, #tpu.memory_space<vmem>>, vector<1x128xf32>
    %26 = vector.broadcast %25 : vector<1x128xf32> to vector<8x128xf32>
    %27 = arith.addf %24, %26 : vector<8x128xf32>
    %cst_22 = arith.constant 0.000000e+00 : f32
    %28 = vector.broadcast %cst_22 : f32 to vector<8x128xf32>
    %29 = arith.maximumf %27, %28 : vector<8x128xf32>
    %c0_23 = arith.constant 0 : index
    %c0_24 = arith.constant 0 : index
    %30 = vector.load %arg10[%c0_23, %c0_24] : memref<1x128xf32, #tpu.memory_space<vmem>>, vector<1x128xf32>
    %31 = vector.broadcast %30 : vector<1x128xf32> to vector<8x128xf32>
    %32 = arith.mulf %29, %31 : vector<8x128xf32>
    %cst_25 = arith.constant dense<0.000000e+00> : vector<8xf32>
    %33 = vector.multi_reduction <add>, %32, %cst_25 [1] : vector<8x128xf32> to vector<8xf32>
    %34 = vector.shape_cast %33 : vector<8xf32> to vector<1x8xf32>
    %c0_26 = arith.constant 0 : index
    %c0_27 = arith.constant 0 : index
    %35 = vector.load %arg11[%c0_26, %c0_27] : memref<1x1xf32, #tpu.memory_space<vmem>>, vector<1x1xf32>
    %36 = vector.broadcast %35 : vector<1x1xf32> to vector<1x8xf32>
    %37 = arith.addf %34, %36 : vector<1x8xf32>
    %c0_28 = arith.constant 0 : index
    %c0_29 = arith.constant 0 : index
    %38 = vector.load %arg12[%c0_28, %c0_29] : memref<1x8xf32, #tpu.memory_space<vmem>>, vector<1x8xf32>
    tpu.vector_store %arg12[%c0_28, %c0_29], %37 {strides = array<i32>} : memref<1x8xf32, #tpu.memory_space<vmem>>, vector<1x8xf32>,
    return
  }
  func.func @transform_0(%arg0: i32) -> (i32, i32) {
    %c0_i32 = arith.constant 0 : i32
    %c0_i32_0 = arith.constant 0 : i32
    return %arg0, %c0_i32 : i32, i32
  }
  func.func @transform_1(%arg0: i32) -> (i32, i32) {
    %c0_i32 = arith.constant 0 : i32
    %c0_i32_0 = arith.constant 0 : i32
    return %arg0, %c0_i32 : i32, i32
  }
  func.func @transform_2(%arg0: i32) -> (i32, i32) {
    %c0_i32 = arith.constant 0 : i32
    %c0_i32_0 = arith.constant 0 : i32
    %c0_i32_1 = arith.constant 0 : i32
    return %c0_i32, %c0_i32_0 : i32, i32
  }
  func.func @transform_3(%arg0: i32) -> (i32, i32) {
    %c0_i32 = arith.constant 0 : i32
    %c0_i32_0 = arith.constant 0 : i32
    %c0_i32_1 = arith.constant 0 : i32
    return %c0_i32, %c0_i32_0 : i32, i32
  }
  func.func @transform_4(%arg0: i32) -> (i32, i32) {
    %c0_i32 = arith.constant 0 : i32
    %c0_i32_0 = arith.constant 0 : i32
    %c0_i32_1 = arith.constant 0 : i32
    return %c0_i32, %c0_i32_0 : i32, i32
  }
  func.func @transform_5(%arg0: i32) -> (i32, i32) {
    %c0_i32 = arith.constant 0 : i32
    %c0_i32_0 = arith.constant 0 : i32
    %c0_i32_1 = arith.constant 0 : i32
    return %c0_i32, %c0_i32_0 : i32, i32
  }
  func.func @transform_6(%arg0: i32) -> (i32, i32) {
    %c0_i32 = arith.constant 0 : i32
    %c0_i32_0 = arith.constant 0 : i32
    %c0_i32_1 = arith.constant 0 : i32
    return %c0_i32, %c0_i32_0 : i32, i32
  }
  func.func @transform_7(%arg0: i32) -> (i32, i32) {
    %c0_i32 = arith.constant 0 : i32
    %c0_i32_0 = arith.constant 0 : i32
    %c0_i32_1 = arith.constant 0 : i32
    return %c0_i32, %c0_i32_0 : i32, i32
  }
  func.func @transform_8(%arg0: i32) -> (i32, i32) {
    %c0_i32 = arith.constant 0 : i32
    %c0_i32_0 = arith.constant 0 : i32
    %c0_i32_1 = arith.constant 0 : i32
    return %c0_i32, %c0_i32_0 : i32, i32
  }
  func.func @transform_9(%arg0: i32) -> (i32, i32) {
    %c0_i32 = arith.constant 0 : i32
    %c0_i32_0 = arith.constant 0 : i32
    %c0_i32_1 = arith.constant 0 : i32
    return %c0_i32, %c0_i32_0 : i32, i32
  }
  func.func @transform_10(%arg0: i32) -> (i32, i32) {
    %c0_i32 = arith.constant 0 : i32
    %c0_i32_0 = arith.constant 0 : i32
    %c0_i32_1 = arith.constant 0 : i32
    return %c0_i32, %c0_i32_0 : i32, i32
  }
  func.func @transform_11(%arg0: i32) -> (i32, i32) {
    %c0_i32 = arith.constant 0 : i32
    %c0_i32_0 = arith.constant 0 : i32
    return %c0_i32, %arg0 : i32, i32
  }
}

</mosaic_0001>

<llo_original>
// kernel: tpu_custom_call.1
$region0: #{tpu_custom_call.1}
  #allocation0 [shape = 'u32[]', space=smem, size = 0x4, offset = 0x4, fixed_abs, tag = 'smem constant byte address 0x4 - core index']
  #allocation1 [shape = 'u32[144,128]{1,0:T(1,128)}', space=vmem, size = 0x12000, scoped, tag = 'internal scratch']
  #allocation2 [shape = 'f32[1,1]{1,0:T(1,128)S(1)}', space=vmem, size = 0x200, scoped, tag = 'scoped memory for tpu_custom_call.1']
  %s0 = inlined_call_operand.hbm [shape: f32[8,32], index: 0, kind: input, shape index: {}]
  %s1 = inlined_call_operand.hbm [shape: f32[8,8], index: 1, kind: input, shape index: {}]
  %s2 = inlined_call_operand.hbm [shape: bf16[32,128], index: 2, kind: input, shape index: {}]
  %s3 = inlined_call_operand.vmem [shape: f32[1,128], index: 3, kind: input, shape index: {}]
  %s4 = inlined_call_operand.hbm [shape: bf16[128,128], index: 4, kind: input, shape index: {}]
  %s5 = inlined_call_operand.vmem [shape: bf16[8,128], index: 5, kind: input, shape index: {}]
  %s6 = inlined_call_operand.vmem [shape: f32[1,128], index: 6, kind: input, shape index: {}]
  %s7 = inlined_call_operand.hbm [shape: bf16[128,128], index: 7, kind: input, shape index: {}]
  %s8 = inlined_call_operand.vmem [shape: f32[1,128], index: 8, kind: input, shape index: {}]
  %s9 = inlined_call_operand.vmem [shape: f32[1,128], index: 9, kind: input, shape index: {}]
  %s10 = inlined_call_operand.<no memory space> [shape: f32[1,1], index: 10, kind: input, shape index: {}]
  %s11 = inlined_call_operand.hbm [shape: f32[1,8], index: 11, kind: output, shape index: {}]
  %s12 = sld [smem:[#allocation0]]
  $region74: #{tpu_custom_call.1} parent=0
    _
  %s14 = ssub.s32 1, %s12
  %s15 = scalar_select 0, %s14, %s12
  %v16 = vstv %s10
  %17 = vst [vmem:[#allocation2] sm:$0x1] %v16
  $region1: #{tpu_custom_call.1} parent=0
    #allocation3 [shape = 'u8[4096]{0}', space=vmem, size = 0x1000, scoped, tag = 'input window, operand 0, single buffered']
    #allocation4 [shape = 's32[1]{0}', space=sflag, size = 0x4, scoped, tag = 'scoped memory for tpu_custom_call.1']
    #allocation5 [shape = 's32[1]{0}', space=sflag, size = 0x4, scoped, tag = 'scoped memory for tpu_custom_call.1']
    #allocation6 [shape = 'u8[4096]{0}', space=vmem, size = 0x1000, scoped, tag = 'input window, operand 1, single buffered']
    #allocation7 [shape = 's32[1]{0}', space=sflag, size = 0x4, scoped, tag = 'scoped memory for tpu_custom_call.1']
    #allocation8 [shape = 'u8[8192]{0}', space=vmem, size = 0x2000, scoped, tag = 'input window, operand 2, single buffered']
    #allocation9 [shape = 'u8[32768]{0}', space=vmem, size = 0x8000, scoped, tag = 'input window, operand 4, single buffered']
    #allocation10 [shape = 's32[1]{0}', space=sflag, size = 0x4, scoped, tag = 'scoped memory for tpu_custom_call.1']
    #allocation11 [shape = 'u8[32768]{0}', space=vmem, size = 0x8000, scoped, tag = 'input window, operand 7, single buffered']
    #allocation12 [shape = 'u8[512]{0}', space=vmem, size = 0x400, scoped, tag = 'output window, operand 0, single buffered']
    %18 = vsyncpa [#allocation4], 0
    %19 = vsyncpa [#allocation7], 0
    %20 = vsyncpa [#allocation10], 0
    %21 = vsyncpa [#allocation5], 0
    // Predicated region
    $region2: #{tpu_custom_call.1} parent=1 // pred_check
      _
    $region3: #{tpu_custom_call.1} parent=1 // pred_check_branch
      %23 = sbr.rel (0) target = $region5
    $region4: #{tpu_custom_call.1} parent=1 // pred_region
      %s25 = ssub.s32 128, 128
      %26 = vsyncadd [#allocation4], %s25
      %s28 = sshll.u32 [#allocation3], 4
      %s29 = int_to_ptr.vmem [resolvable:$true] %s28
      %31 = dma.hbm_to_vmem [thread:$0]  %s0, 128, %s29, [#allocation4]
    $region5: #{tpu_custom_call.1} parent=1 // pred_fallthru
      _
    // Predicated region
    $region6: #{tpu_custom_call.1} parent=1 // pred_check
      _
    $region7: #{tpu_custom_call.1} parent=1 // pred_check_branch
      %33 = sbr.rel (0) target = $region9
    $region8: #{tpu_custom_call.1} parent=1 // pred_region
      %s35 = ssub.s32 128, 128
      %36 = vsyncadd [#allocation7], %s35
      %s38 = sshll.u32 [#allocation6], 4
      %s39 = int_to_ptr.vmem [resolvable:$true] %s38
      %41 = dma.hbm_to_vmem [thread:$0]  %s1, 128, %s39, [#allocation7]
    $region9: #{tpu_custom_call.1} parent=1 // pred_fallthru
      _
    // Predicated region
    $region10: #{tpu_custom_call.1} parent=1 // pred_check
      _
    $region11: #{tpu_custom_call.1} parent=1 // pred_check_branch
      %43 = sbr.rel (0) target = $region13
    $region12: #{tpu_custom_call.1} parent=1 // pred_region
      %s45 = ssub.s32 256, 256
      %46 = vsyncadd [#allocation7], %s45
      %s47 = sshll.u32 [#allocation8], 4
      %s48 = int_to_ptr.vmem [resolvable:$true] %s47
      %53 = dma.hbm_to_vmem [thread:$0]  %s2, 256, %s48, [#allocation7], 64, 64, 4
    $region13: #{tpu_custom_call.1} parent=1 // pred_fallthru
      _
    // Predicated region
    $region14: #{tpu_custom_call.1} parent=1 // pred_check
      _
    $region15: #{tpu_custom_call.1} parent=1 // pred_check_branch
      %55 = sbr.rel (0) target = $region17
    $region16: #{tpu_custom_call.1} parent=1 // pred_region
      _
    $region17: #{tpu_custom_call.1} parent=1 // pred_fallthru
      _
    // Predicated region
    $region18: #{tpu_custom_call.1} parent=1 // pred_check
      _
    $region19: #{tpu_custom_call.1} parent=1 // pred_check_branch
      %57 = sbr.rel (0) target = $region21
    $region20: #{tpu_custom_call.1} parent=1 // pred_region
      %s59 = ssub.s32 1024, 1024
      %60 = vsyncadd [#allocation10], %s59
      %s61 = sshll.u32 [#allocation9], 4
      %s62 = int_to_ptr.vmem [resolvable:$true] %s61
      %67 = dma.hbm_to_vmem [thread:$0]  %s4, 1024, %s62, [#allocation10], 64, 64, 4
    $region21: #{tpu_custom_call.1} parent=1 // pred_fallthru
      _
    // Predicated region
    $region22: #{tpu_custom_call.1} parent=1 // pred_check
      _
    $region23: #{tpu_custom_call.1} parent=1 // pred_check_branch
      %69 = sbr.rel (0) target = $region25
    $region24: #{tpu_custom_call.1} parent=1 // pred_region
      _
    $region25: #{tpu_custom_call.1} parent=1 // pred_fallthru
      _
    // Predicated region
    $region26: #{tpu_custom_call.1} parent=1 // pred_check
      _
    $region27: #{tpu_custom_call.1} parent=1 // pred_check_branch
      %71 = sbr.rel (0) target = $region29
    $region28: #{tpu_custom_call.1} parent=1 // pred_region
      _
    $region29: #{tpu_custom_call.1} parent=1 // pred_fallthru
      _
    // Predicated region
    $region30: #{tpu_custom_call.1} parent=1 // pred_check
      _
    $region31: #{tpu_custom_call.1} parent=1 // pred_check_branch
      %73 = sbr.rel (0) target = $region33
    $region32: #{tpu_custom_call.1} parent=1 // pred_region
      %s75 = ssub.s32 1024, 1024
      %76 = vsyncadd [#allocation10], %s75
      %s77 = sshll.u32 [#allocation11], 4
      %s78 = int_to_ptr.vmem [resolvable:$true] %s77
      %83 = dma.hbm_to_vmem [thread:$0]  %s7, 1024, %s78, [#allocation10], 64, 64, 4
    $region33: #{tpu_custom_call.1} parent=1 // pred_fallthru
      _
    // Predicated region
    $region34: #{tpu_custom_call.1} parent=1 // pred_check
      _
    $region35: #{tpu_custom_call.1} parent=1 // pred_check_branch
      %85 = sbr.rel (0) target = $region37
    $region36: #{tpu_custom_call.1} parent=1 // pred_region
      _
    $region37: #{tpu_custom_call.1} parent=1 // pred_fallthru
      _
    // Predicated region
    $region38: #{tpu_custom_call.1} parent=1 // pred_check
      _
    $region39: #{tpu_custom_call.1} parent=1 // pred_check_branch
      %87 = sbr.rel (0) target = $region41
    $region40: #{tpu_custom_call.1} parent=1 // pred_region
      _
    $region41: #{tpu_custom_call.1} parent=1 // pred_fallthru
      _
    // Predicated region
    $region42: #{tpu_custom_call.1} parent=1 // pred_check
      _
    $region43: #{tpu_custom_call.1} parent=1 // pred_check_branch
      %89 = sbr.rel (0) target = $region45
    $region44: #{tpu_custom_call.1} parent=1 // pred_region
      _
    $region45: #{tpu_custom_call.1} parent=1 // pred_fallthru
      _
    // Predicated region
    $region46: #{tpu_custom_call.1} parent=1 // pred_check
      _
    $region47: #{tpu_custom_call.1} parent=1 // pred_check_branch
      %91 = sbr.rel (0) target = $region49
    $region48: #{tpu_custom_call.1} parent=1 // pred_region
      %92 = dma.done [#allocation4], 128
    $region49: #{tpu_custom_call.1} parent=1 // pred_fallthru
      _
    // Predicated region
    $region50: #{tpu_custom_call.1} parent=1 // pred_check
      _
    $region51: #{tpu_custom_call.1} parent=1 // pred_check_branch
      %94 = sbr.rel (0) target = $region53
    $region52: #{tpu_custom_call.1} parent=1 // pred_region
      %95 = dma.done [#allocation7], 128
    $region53: #{tpu_custom_call.1} parent=1 // pred_fallthru
      _
    // Predicated region
    $region54: #{tpu_custom_call.1} parent=1 // pred_check
      _
    $region55: #{tpu_custom_call.1} parent=1 // pred_check_branch
      %97 = sbr.rel (0) target = $region57
    $region56: #{tpu_custom_call.1} parent=1 // pred_region
      %98 = dma.done [#allocation7], 256
    $region57: #{tpu_custom_call.1} parent=1 // pred_fallthru
      _
    // Predicated region
    $region58: #{tpu_custom_call.1} parent=1 // pred_check
      _
    $region59: #{tpu_custom_call.1} parent=1 // pred_check_branch
      %100 = sbr.rel (0) target = $region61
    $region60: #{tpu_custom_call.1} parent=1 // pred_region
      %101 = dma.done [#allocation10], 1024
    $region61: #{tpu_custom_call.1} parent=1 // pred_fallthru
      _
    // Predicated region
    $region62: #{tpu_custom_call.1} parent=1 // pred_check
      _
    $region63: #{tpu_custom_call.1} parent=1 // pred_check_branch
      %103 = sbr.rel (0) target = $region65
    $region64: #{tpu_custom_call.1} parent=1 // pred_region
      %104 = dma.done [#allocation10], 1024
    $region65: #{tpu_custom_call.1} parent=1 // pred_fallthru
      _
    %v106 = vld [vmem:[#allocation3] sm:$0xff]
    %v107 = vpack.c.bf16 %v106, %v106
    %v108 = vld [vmem:[#allocation6] sm:$0xff]
    %v109 = vpack.c.bf16 %v108, %v108
    %v110 = vld [vmem:[#allocation8] sm:$0xf]
    %v111 = vld [vmem:[#allocation8 + $0x4] sm:$0xf]
    %v112 = vld [vmem:[#allocation8 + $0x8] sm:$0xf]
    %v113 = vld [vmem:[#allocation8 + $0xc] sm:$0xf]
    %v114 = vld [vmem:[%s3] sm:$0x1]
    %v116 = vlaneseq
    %v117 = vshrl.u32 %v116, 7
    %v118 = vsub.s32 0, %v117
    %v119 = vrot.slane %v114, %v118
    %v125 = vunpack.c.l.b16 %v110
    %v126 = vunpack.c.l.b16 %v111
    %v127 = vunpack.c.l.b16 %v112
    %v128 = vunpack.c.l.b16 %v113
    %v129 = vpack.c.b16 %v126, %v125
    %v130 = vpack.c.b16 %v128, %v127
    %vm133 = vcmask 261120
    %v135 = vsel %vm133, %v107, 0
    %137 = vmatprep.subr.bf16.mxu0 0
    %138 = vmatpush1.bf16.msra.mxu0 %v129
    %139 = vmatprep.subr.bf16.mxu0 0
    %140 = vmatpush1.bf16.msra.mxu0 %v130
    %141 = vmatprep.subr.bf16.mxu0 0
    %142 = vmatpush1.bf16.msra.mxu0 0
    %143 = vmatprep.subr.bf16.mxu0 0
    %144 = vmatpush1.bf16.msra.mxu0 0
    %145 = vmatprep.subr.bf16.mxu0 0
    %146 = vmatpush1.bf16.msra.mxu0 0
    %147 = vmatprep.subr.bf16.mxu0 0
    %148 = vmatpush1.bf16.msra.mxu0 0
    %149 = vmatprep.subr.bf16.mxu0 0
    %150 = vmatpush1.bf16.msra.mxu0 0
    %151 = vmatprep.subr.bf16.mxu0 0
    %152 = vmatpush1.bf16.msra.mxu0 0
    %153 = vmatprep.subr.bf16.mxu0 0
    %154 = vmatpush1.bf16.msra.mxu0 0
    %155 = vmatprep.subr.bf16.mxu0 0
    %156 = vmatpush1.bf16.msra.mxu0 0
    %157 = vmatprep.subr.bf16.mxu0 0
    %158 = vmatpush1.bf16.msra.mxu0 0
    %159 = vmatprep.subr.bf16.mxu0 0
    %160 = vmatpush1.bf16.msra.mxu0 0
    %161 = vmatprep.subr.bf16.mxu0 0
    %162 = vmatpush1.bf16.msra.mxu0 0
    %163 = vmatprep.subr.bf16.mxu0 0
    %164 = vmatpush1.bf16.msra.mxu0 0
    %165 = vmatprep.subr.bf16.mxu0 0
    %166 = vmatpush1.bf16.msra.mxu0 0
    %167 = vmatprep.subr.bf16.mxu0 0
    %168 = vmatpush1.bf16.msra.mxu0 0
    %169 = vmatprep.mubr.bf16.mxu0 0
    %170 = vmatmul.mubr.bf16.gmra.mrb[0].mxu0 %v135
    %v171 = vpop.f32.mrb[0].mxu0
    %v172 = vadd.f32 %v119, %v171
    %v173 = vpop.f32.mrb[0].mxu0
    %v174 = vpop.f32.mrb[0].mxu0
    %v175 = vpop.f32.mrb[0].mxu0
    %176 = vdwg.mxu0
    %v177 = vmax.f32 %v172, 0.0
    %v178 = vpack.c.bf16 %v177, %v177
    %v179 = vld [vmem:[#allocation9] sm:$0xf]
    %v180 = vld [vmem:[#allocation9 + $0x4] sm:$0xf]
    %v181 = vld [vmem:[#allocation9 + $0x8] sm:$0xf]
    %v182 = vld [vmem:[#allocation9 + $0xc] sm:$0xf]
    %v183 = vld [vmem:[#allocation9 + $0x10] sm:$0xf]
    %v184 = vld [vmem:[#allocation9 + $0x14] sm:$0xf]
    %v185 = vld [vmem:[#allocation9 + $0x18] sm:$0xf]
    %v186 = vld [vmem:[#allocation9 + $0x1c] sm:$0xf]
    %v187 = vld [vmem:[#allocation9 + $0x20] sm:$0xf]
    %v188 = vld [vmem:[#allocation9 + $0x24] sm:$0xf]
    %v189 = vld [vmem:[#allocation9 + $0x28] sm:$0xf]
    %v190 = vld [vmem:[#allocation9 + $0x2c] sm:$0xf]
    %v191 = vld [vmem:[#allocation9 + $0x30] sm:$0xf]
    %v192 = vld [vmem:[#allocation9 + $0x34] sm:$0xf]
    %v193 = vld [vmem:[#allocation9 + $0x38] sm:$0xf]
    %v194 = vld [vmem:[#allocation9 + $0x3c] sm:$0xf]
    %v195 = vld [vmem:[%s5] sm:$0xf]
    %vm196 = vcmask 64512
    %v198 = vsel %vm196, %v109, 0
    %vm200 = vcmask 1043456
    %v202 = vsel %vm200, %v195, 0
    %204 = vmatprep.subr.bf16.mxu0 0
    %205 = vmatpush1.bf16.msra.mxu0 %v202
    %206 = vmatprep.subr.bf16.mxu0 0
    %207 = vmatpush1.bf16.msra.mxu0 0
    %208 = vmatprep.subr.bf16.mxu0 0
    %209 = vmatpush1.bf16.msra.mxu0 0
    %210 = vmatprep.subr.bf16.mxu0 0
    %211 = vmatpush1.bf16.msra.mxu0 0
    %212 = vmatprep.subr.bf16.mxu0 0
    %213 = vmatpush1.bf16.msra.mxu0 0
    %214 = vmatprep.subr.bf16.mxu0 0
    %215 = vmatpush1.bf16.msra.mxu0 0
    %216 = vmatprep.subr.bf16.mxu0 0
    %217 = vmatpush1.bf16.msra.mxu0 0
    %218 = vmatprep.subr.bf16.mxu0 0
    %219 = vmatpush1.bf16.msra.mxu0 0
    %220 = vmatprep.subr.bf16.mxu0 0
    %221 = vmatpush1.bf16.msra.mxu0 0
    %222 = vmatprep.subr.bf16.mxu0 0
    %223 = vmatpush1.bf16.msra.mxu0 0
    %224 = vmatprep.subr.bf16.mxu0 0
    %225 = vmatpush1.bf16.msra.mxu0 0
    %226 = vmatprep.subr.bf16.mxu0 0
    %227 = vmatpush1.bf16.msra.mxu0 0
    %228 = vmatprep.subr.bf16.mxu0 0
    %229 = vmatpush1.bf16.msra.mxu0 0
    %230 = vmatprep.subr.bf16.mxu0 0
    %231 = vmatpush1.bf16.msra.mxu0 0
    %232 = vmatprep.subr.bf16.mxu0 0
    %233 = vmatpush1.bf16.msra.mxu0 0
    %234 = vmatprep.subr.bf16.mxu0 0
    %235 = vmatpush1.bf16.msra.mxu0 0
    %236 = vmatprep.mubr.bf16.mxu0 0
    %237 = vmatmul.mubr.bf16.gmra.mrb[0].mxu0 %v198
    %v238 = vpop.f32.mrb[0].mxu0
    %v239 = vadd.f32 0.0, %v238
    %v240 = vpop.f32.mrb[0].mxu0
    %v241 = vpop.f32.mrb[0].mxu0
    %v242 = vpop.f32.mrb[0].mxu0
    %243 = vdwg.mxu0
    %v260 = vunpack.c.l.b16 %v179
    %v261 = vunpack.c.l.b16 %v180
    %v262 = vunpack.c.l.b16 %v181
    %v263 = vunpack.c.l.b16 %v182
    %v264 = vunpack.c.l.b16 %v183
    %v265 = vunpack.c.l.b16 %v184
    %v266 = vunpack.c.l.b16 %v185
    %v267 = vunpack.c.l.b16 %v186
    %v268 = vunpack.c.l.b16 %v187
    %v269 = vunpack.c.l.b16 %v188
    %v270 = vunpack.c.l.b16 %v189
    %v271 = vunpack.c.l.b16 %v190
    %v272 = vunpack.c.l.b16 %v191
    %v273 = vunpack.c.l.b16 %v192
    %v274 = vunpack.c.l.b16 %v193
    %v275 = vunpack.c.l.b16 %v194
    %v276 = vpack.c.b16 %v261, %v260
    %v277 = vpack.c.b16 %v263, %v262
    %v278 = vpack.c.b16 %v265, %v264
    %v279 = vpack.c.b16 %v267, %v266
    %v280 = vpack.c.b16 %v269, %v268
    %v281 = vpack.c.b16 %v271, %v270
    %v282 = vpack.c.b16 %v273, %v272
    %v283 = vpack.c.b16 %v275, %v274
    %292 = vmatprep.subr.bf16.mxu0 0
    %293 = vmatpush1.bf16.msra.mxu0 %v276
    %294 = vmatprep.subr.bf16.mxu0 0
    %295 = vmatpush1.bf16.msra.mxu0 %v277
    %296 = vmatprep.subr.bf16.mxu0 0
    %297 = vmatpush1.bf16.msra.mxu0 %v278
    %298 = vmatprep.subr.bf16.mxu0 0
    %299 = vmatpush1.bf16.msra.mxu0 %v279
    %300 = vmatprep.subr.bf16.mxu0 0
    %301 = vmatpush1.bf16.msra.mxu0 %v280
    %302 = vmatprep.subr.bf16.mxu0 0
    %303 = vmatpush1.bf16.msra.mxu0 %v281
    %304 = vmatprep.subr.bf16.mxu0 0
    %305 = vmatpush1.bf16.msra.mxu0 %v282
    %306 = vmatprep.subr.bf16.mxu0 0
    %307 = vmatpush1.bf16.msra.mxu0 %v283
    %308 = vmatprep.subr.bf16.mxu0 0
    %309 = vmatpush1.bf16.msra.mxu0 0
    %310 = vmatprep.subr.bf16.mxu0 0
    %311 = vmatpush1.bf16.msra.mxu0 0
    %312 = vmatprep.subr.bf16.mxu0 0
    %313 = vmatpush1.bf16.msra.mxu0 0
    %314 = vmatprep.subr.bf16.mxu0 0
    %315 = vmatpush1.bf16.msra.mxu0 0
    %316 = vmatprep.subr.bf16.mxu0 0
    %317 = vmatpush1.bf16.msra.mxu0 0
    %318 = vmatprep.subr.bf16.mxu0 0
    %319 = vmatpush1.bf16.msra.mxu0 0
    %320 = vmatprep.subr.bf16.mxu0 0
    %321 = vmatpush1.bf16.msra.mxu0 0
    %322 = vmatprep.subr.bf16.mxu0 0
    %323 = vmatpush1.bf16.msra.mxu0 0
    %324 = vmatprep.mubr.bf16.mxu0 0
    %325 = vmatmul.mubr.bf16.gmra.mrb[0].mxu0 %v178
    %v326 = vpop.f32.mrb[0].mxu0
    %v327 = vadd.f32 %v239, %v326
    %v328 = vpop.f32.mrb[0].mxu0
    %v329 = vpop.f32.mrb[0].mxu0
    %v330 = vpop.f32.mrb[0].mxu0
    %331 = vdwg.mxu0
    %v332 = vld [vmem:[%s6] sm:$0x1]
    %v334 = vlaneseq
    %v335 = vshrl.u32 %v334, 7
    %v336 = vsub.s32 0, %v335
    %v337 = vrot.slane %v332, %v336
    %v339 = vadd.f32 %v327, %v337
    %v340 = vmax.f32 %v339, 0.0
    %v341 = vpack.c.bf16 %v340, %v340
    %v342 = vld [vmem:[#allocation11] sm:$0xf]
    %v343 = vld [vmem:[#allocation11 + $0x4] sm:$0xf]
    %v344 = vld [vmem:[#allocation11 + $0x8] sm:$0xf]
    %v345 = vld [vmem:[#allocation11 + $0xc] sm:$0xf]
    %v346 = vld [vmem:[#allocation11 + $0x10] sm:$0xf]
    %v347 = vld [vmem:[#allocation11 + $0x14] sm:$0xf]
    %v348 = vld [vmem:[#allocation11 + $0x18] sm:$0xf]
    %v349 = vld [vmem:[#allocation11 + $0x1c] sm:$0xf]
    %v350 = vld [vmem:[#allocation11 + $0x20] sm:$0xf]
    %v351 = vld [vmem:[#allocation11 + $0x24] sm:$0xf]
    %v352 = vld [vmem:[#allocation11 + $0x28] sm:$0xf]
    %v353 = vld [vmem:[#allocation11 + $0x2c] sm:$0xf]
    %v354 = vld [vmem:[#allocation11 + $0x30] sm:$0xf]
    %v355 = vld [vmem:[#allocation11 + $0x34] sm:$0xf]
    %v356 = vld [vmem:[#allocation11 + $0x38] sm:$0xf]
    %v357 = vld [vmem:[#allocation11 + $0x3c] sm:$0xf]
    %v358 = vld [vmem:[%s8] sm:$0x1]
    %v360 = vlaneseq
    %v361 = vshrl.u32 %v360, 7
    %v362 = vsub.s32 0, %v361
    %v363 = vrot.slane %v358, %v362
    %v381 = vunpack.c.l.b16 %v342
    %v382 = vunpack.c.l.b16 %v343
    %v383 = vunpack.c.l.b16 %v344
    %v384 = vunpack.c.l.b16 %v345
    %v385 = vunpack.c.l.b16 %v346
    %v386 = vunpack.c.l.b16 %v347
    %v387 = vunpack.c.l.b16 %v348
    %v388 = vunpack.c.l.b16 %v349
    %v389 = vunpack.c.l.b16 %v350
    %v390 = vunpack.c.l.b16 %v351
    %v391 = vunpack.c.l.b16 %v352
    %v392 = vunpack.c.l.b16 %v353
    %v393 = vunpack.c.l.b16 %v354
    %v394 = vunpack.c.l.b16 %v355
    %v395 = vunpack.c.l.b16 %v356
    %v396 = vunpack.c.l.b16 %v357
    %v397 = vpack.c.b16 %v382, %v381
    %v398 = vpack.c.b16 %v384, %v383
    %v399 = vpack.c.b16 %v386, %v385
    %v400 = vpack.c.b16 %v388, %v387
    %v401 = vpack.c.b16 %v390, %v389
    %v402 = vpack.c.b16 %v392, %v391
    %v403 = vpack.c.b16 %v394, %v393
    %v404 = vpack.c.b16 %v396, %v395
    %413 = vmatprep.subr.bf16.mxu0 0
    %414 = vmatpush1.bf16.msra.mxu0 %v397
    %415 = vmatprep.subr.bf16.mxu0 0
    %416 = vmatpush1.bf16.msra.mxu0 %v398
    %417 = vmatprep.subr.bf16.mxu0 0
    %418 = vmatpush1.bf16.msra.mxu0 %v399
    %419 = vmatprep.subr.bf16.mxu0 0
    %420 = vmatpush1.bf16.msra.mxu0 %v400
    %421 = vmatprep.subr.bf16.mxu0 0
    %422 = vmatpush1.bf16.msra.mxu0 %v401
    %423 = vmatprep.subr.bf16.mxu0 0
    %424 = vmatpush1.bf16.msra.mxu0 %v402
    %425 = vmatprep.subr.bf16.mxu0 0
    %426 = vmatpush1.bf16.msra.mxu0 %v403
    %427 = vmatprep.subr.bf16.mxu0 0
    %428 = vmatpush1.bf16.msra.mxu0 %v404
    %429 = vmatprep.subr.bf16.mxu0 0
    %430 = vmatpush1.bf16.msra.mxu0 0
    %431 = vmatprep.subr.bf16.mxu0 0
    %432 = vmatpush1.bf16.msra.mxu0 0
    %433 = vmatprep.subr.bf16.mxu0 0
    %434 = vmatpush1.bf16.msra.mxu0 0
    %435 = vmatprep.subr.bf16.mxu0 0
    %436 = vmatpush1.bf16.msra.mxu0 0
    %437 = vmatprep.subr.bf16.mxu0 0
    %438 = vmatpush1.bf16.msra.mxu0 0
    %439 = vmatprep.subr.bf16.mxu0 0
    %440 = vmatpush1.bf16.msra.mxu0 0
    %441 = vmatprep.subr.bf16.mxu0 0
    %442 = vmatpush1.bf16.msra.mxu0 0
    %443 = vmatprep.subr.bf16.mxu0 0
    %444 = vmatpush1.bf16.msra.mxu0 0
    %445 = vmatprep.mubr.bf16.mxu0 0
    %446 = vmatmul.mubr.bf16.gmra.mrb[0].mxu0 %v341
    %v447 = vpop.f32.mrb[0].mxu0
    %v448 = vadd.f32 %v363, %v447
    %v449 = vpop.f32.mrb[0].mxu0
    %v450 = vpop.f32.mrb[0].mxu0
    %v451 = vpop.f32.mrb[0].mxu0
    %452 = vdwg.mxu0
    %v453 = vmax.f32 %v448, 0.0
    %v454 = vld [vmem:[%s9] sm:$0x1]
    %v456 = vlaneseq
    %v457 = vshrl.u32 %v456, 7
    %v458 = vsub.s32 0, %v457
    %v459 = vrot.slane %v454, %v458
    %v461 = vmul.f32 %v453, %v459
    %462 = vadd.xlane.f32.xlu0 %v461
    %v463 = vpop.xlane.xlu0 %462
    %v464 = vld [vmem:[#allocation2] sm:$0x1]
    %466 = vset.pattern.permute.xlu0 0
    %467 = vperm.xlu0 %466, %v464
    %v468 = vpop.permute.xlu0 %467
    %v470 = vlaneseq
    %v471 = vshrl.u32 %v470, 7
    %v472 = vsub.s32 0, %v471
    %v473 = vrot.slane %v468, %v472
    %v474 = vadd.f32 %v463, %v473
    %v476 = vlaneseq
    %v477 = vand.u32 %v476, 127
    %v478 = vlaneseq
    %v479 = vshrl.u32 %v478, 7
    %v480 = vsub.s32 %v477, %v479
    %v481 = vrot.slane %v474, %v480
    %vm483 = vcmask 57344
    %484 = vst.msk [vmem:[#allocation12] sm:$0x1] %vm483, %v481
    // Predicated region
    $region66: #{tpu_custom_call.1} parent=1 // pred_check
      _
    $region67: #{tpu_custom_call.1} parent=1 // pred_check_branch
      %486 = sbr.rel (0) target = $region69
    $region68: #{tpu_custom_call.1} parent=1 // pred_region
      %s488 = ssub.s32 16, 16
      %489 = vsyncadd [#allocation5], %s488
      %s491 = sshll.u32 [#allocation12], 4
      %s492 = int_to_ptr.vmem [resolvable:$true] %s491
      %494 = dma.vmem_to_hbm [thread:$0]  %s492, 16, %s11, [#allocation5]
    $region69: #{tpu_custom_call.1} parent=1 // pred_fallthru
      _
    // Predicated region
    $region70: #{tpu_custom_call.1} parent=1 // pred_check
      _
    $region71: #{tpu_custom_call.1} parent=1 // pred_check_branch
      %496 = sbr.rel (0) target = $region73
    $region72: #{tpu_custom_call.1} parent=1 // pred_region
      %497 = dma.done [#allocation5], 16
    $region73: #{tpu_custom_call.1} parent=1 // pred_fallthru
      _
    %498 = vsyncpa [#allocation4], 1
    %499 = vsyncpa [#allocation7], 1
    %500 = vsyncpa [#allocation10], 1
    %501 = vsyncpa [#allocation5], 1

</llo_original>
